<compile_context>
chip_gen: v5e
topology: v5e:2x2
jax: 0.10.0
libtpu: 0.0.40
codegen_flags: <defaults>
</compile_context>

<pallas_src>
from functools import partial

import jax
import jax.numpy as jnp
from jax import lax
from jax.experimental import pallas as pl
from jax.experimental.pallas import tpu as pltpu


NEG_BIG = -1e30  # bias for padded fc2 columns -> never selected by softmax/argmax


def actor_kernel(state_ref, params_ref, gumbel_ref, probs_ref, action_ref):
    """probs = softmax(fc2(relu(W1f[ix] + W1f[S+iy] + b1))); action = Gumbel-max sample.

    params_ref rows:
      [0, 2S)           folded embedding+fc1 rows  (x table stacked over y table)
      [2S]              b1
      [2S+1, 2S+1+H)    fc2 weight, zero-padded from A to H columns
      [2S+1+H]          fc2 bias, padded columns set to NEG_BIG
    """
    B, A = probs_ref.shape
    R, H = params_ref.shape
    S = (R - H - 2) // 2
    b1_row = 2 * S
    w2_start = 2 * S + 1
    b2_row = w2_start + H

    # ---- fused embedding + fc1: two dynamic row gathers + add per batch row.
    rows = []
    for i in range(B):  # B is tiny and static
        ix = state_ref[i, 0]
        iy = state_ref[i, 1]
        rows.append(params_ref[pl.ds(ix, 1), :] + params_ref[pl.ds(S + iy, 1), :])
    h = jnp.concatenate(rows, axis=0) + params_ref[b1_row:b1_row + 1, :]
    h = jnp.maximum(h, 0.0)                                       # (B, H) relu

    # ---- fc2 -> logits (H-wide, lane-dense; padded columns forced to NEG_BIG)
    w2 = params_ref[w2_start:w2_start + H, :]                     # (H, H)
    b2 = params_ref[b2_row:b2_row + 1, :]                         # (1, H)
    logits = jnp.dot(h, w2, preferred_element_type=jnp.float32) + b2

    # ---- exact softmax over the padded width (padded cols contribute exp(-inf)=0)
    m = jnp.max(logits, axis=-1, keepdims=True)
    e = jnp.exp(logits - m)
    p = e / jnp.sum(e, axis=-1, keepdims=True)
    # TODO(synk): if B is ever batched up, lay probs out lane-dense (pad A to 128
    # or emit (A, B)); irrelevant at (2, 8).
    probs_ref[...] = p[:, :A]

    # ---- fused categorical sample via Gumbel-max on raw logits
    # (padded columns sit at ~NEG_BIG and can never win).
    pert = logits + gumbel_ref[...]                               # (B, H)
    pmax = jnp.max(pert, axis=-1, keepdims=True)
    lane = lax.broadcasted_iota(jnp.int32, pert.shape, 1)
    cand = jnp.where(pert >= pmax, lane, H)                       # sentinel for non-max
    act = jnp.min(cand, axis=-1, keepdims=True)                   # (B, 1) argmax indices
    action_ref[...] = act[:1, :]                                  # torch returns action[0]


def init_params(key, state_dim, action_dim, embedding_dim=32):
    """Deterministic synthetic parameter init (kaiming-uniform-like scaling)."""
    ks = jax.random.split(key, 6)

    def unif(k, shape, fan_in):
        bound = (6.0 / fan_in) ** 0.5
        return jax.random.uniform(k, shape, jnp.float32, -bound, bound)

    return {
        "x_emb": jax.random.normal(ks[0], (state_dim, embedding_dim), jnp.float32),
        "y_emb": jax.random.normal(ks[1], (state_dim, embedding_dim), jnp.float32),
        "w1": unif(ks[2], (embedding_dim * 2, 64), embedding_dim * 2),
        "b1": unif(ks[3], (1, 64), embedding_dim * 2),
        "w2": unif(ks[4], (64, action_dim), 64),
        "b2": unif(ks[5], (1, action_dim), 64),
    }


def fold_params(params, action_dim):
    """Fold embeddings into fc1 and pack everything into one (2S+H+2, H) buffer.

    relu(cat(x_emb[ix], y_emb[iy]) @ W1 + b1)
      == relu(W1f[ix] + W1f[S + iy] + b1),  W1f = concat(x_emb @ W1[:E], y_emb @ W1[E:])
    """
    E = params["x_emb"].shape[1]
    w1 = params["w1"]
    H = w1.shape[1]
    A = action_dim

    w1f = jnp.concatenate([params["x_emb"] @ w1[:E, :],
                           params["y_emb"] @ w1[E:, :]], axis=0)      # (2S, H)
    b1 = params["b1"].reshape(1, H)
    w2p = jnp.zeros((H, H), jnp.float32).at[:, :A].set(params["w2"])  # (H, H)
    b2p = jnp.full((1, H), NEG_BIG, jnp.float32).at[:, :A].set(
        params["b2"].reshape(1, A))                                    # (1, H)
    return jnp.concatenate([w1f, b1, w2p, b2p], axis=0)               # (2S+H+2, H)


@partial(jax.jit, static_argnames=("action_dim",))
def deterministic_actor_forward(state, packed, key, *, action_dim):
    """Returns (action, action_probs). `action` mirrors torch's `multinomial(p, 1)[0]`."""
    B = state.shape[0]
    H = packed.shape[1]

    gumbel = jax.random.gumbel(key, (B, H), jnp.float32)

    smem = pl.BlockSpec(memory_space=pltpu.MemorySpace.SMEM)
    vmem = pl.BlockSpec(memory_space=pltpu.MemorySpace.VMEM)

    probs, action = pl.pallas_call(
        actor_kernel,
        out_shape=(jax.ShapeDtypeStruct((B, action_dim), jnp.float32),
                   jax.ShapeDtypeStruct((1, 1), jnp.int32)),
        in_specs=[smem, vmem, vmem],
        out_specs=(vmem, vmem),
    )(state.astype(jnp.int32), packed, gumbel)

    # torch: action = multinomial(probs, 1); return action[0]  -> shape (1,)
    return action[0], probs


def reference_probs(state, params):
    """Pure-JAX reference for the probability path (unfolded params)."""
    x = params["x_emb"][state[:, 0]]
    y = params["y_emb"][state[:, 1]]
    se = jnp.concatenate([x, y], axis=-1)
    h = jax.nn.relu(se @ params["w1"] + params["b1"])
    logits = h @ params["w2"] + params["b2"]
    return jax.nn.softmax(logits, axis=-1)


if __name__ == "__main__":
    STATE_DIM = 16     # value range of each state coordinate
    ACTION_DIM = 8
    EMB_DIM = 32
    BATCH = 2

    root = jax.random.PRNGKey(0)
    k_param, k_state, k_sample = jax.random.split(root, 3)

    params = init_params(k_param, STATE_DIM, ACTION_DIM, EMB_DIM)
    packed = fold_params(params, ACTION_DIM)
    state = jax.random.randint(k_state, (BATCH, 2), 0, STATE_DIM, dtype=jnp.int32)

    action, probs = deterministic_actor_forward(state, packed, k_sample,
                                                action_dim=ACTION_DIM)
    action = jax.block_until_ready(action)
    probs = jax.block_until_ready(probs)

    # sanity: probs rows sum to ~1, match the pure-JAX reference, and the
    # sampled action is a valid index.
    ref = reference_probs(state, params)
    assert probs.shape == (BATCH, ACTION_DIM)
    assert abs(float(probs[0].sum()) - 1.0) < 1e-4
    assert float(jnp.max(jnp.abs(probs - ref))) < 1e-4
    assert action.shape == (1,)
    assert 0 <= int(action[0]) < ACTION_DIM

    print("KERNEL_OK")
</pallas_src>

<mosaic_0001>
module attributes {stable_mosaic.version = 11 : i64} {
  func.func @actor_kernel(%arg0: memref<2x2xi32, #tpu.memory_space<smem>>, %arg1: memref<98x64xf32, #tpu.memory_space<vmem>>, %arg2: memref<2x64xf32, #tpu.memory_space<vmem>>, %arg3: memref<2x8xf32, #tpu.memory_space<vmem>>, %arg4: memref<1x1xi32, #tpu.memory_space<vmem>>) attributes {dimension_semantics = [], scalar_prefetch = 0 : i64, scratch_operands = 0 : i64, tpu.core_type = #tpu.core_type<tc>} {
    %c0 = arith.constant 0 : index
    %c0_0 = arith.constant 0 : index
    %0 = memref.load %arg0[%c0, %c0_0] : memref<2x2xi32, #tpu.memory_space<smem>>
    %c0_1 = arith.constant 0 : index
    %c1 = arith.constant 1 : index
    %1 = memref.load %arg0[%c0_1, %c1] : memref<2x2xi32, #tpu.memory_space<smem>>
    %2 = arith.index_cast %0 : i32 to index
    %c0_2 = arith.constant 0 : index
    %3 = vector.load %arg1[%2, %c0_2] : memref<98x64xf32, #tpu.memory_space<vmem>>, vector<1x64xf32>
    %c16_i32 = arith.constant 16 : i32
    %4 = arith.addi %c16_i32, %1 : i32
    %5 = arith.index_cast %4 : i32 to index
    %c0_3 = arith.constant 0 : index
    %6 = vector.load %arg1[%5, %c0_3] : memref<98x64xf32, #tpu.memory_space<vmem>>, vector<1x64xf32>
    %7 = arith.addf %3, %6 : vector<1x64xf32>
    %c1_4 = arith.constant 1 : index
    %c0_5 = arith.constant 0 : index
    %8 = memref.load %arg0[%c1_4, %c0_5] : memref<2x2xi32, #tpu.memory_space<smem>>
    %c1_6 = arith.constant 1 : index
    %c1_7 = arith.constant 1 : index
    %9 = memref.load %arg0[%c1_6, %c1_7] : memref<2x2xi32, #tpu.memory_space<smem>>
    %10 = arith.index_cast %8 : i32 to index
    %c0_8 = arith.constant 0 : index
    %11 = vector.load %arg1[%10, %c0_8] : memref<98x64xf32, #tpu.memory_space<vmem>>, vector<1x64xf32>
    %c16_i32_9 = arith.constant 16 : i32
    %12 = arith.addi %c16_i32_9, %9 : i32
    %13 = arith.index_cast %12 : i32 to index
    %c0_10 = arith.constant 0 : index
    %14 = vector.load %arg1[%13, %c0_10] : memref<98x64xf32, #tpu.memory_space<vmem>>, vector<1x64xf32>
    %15 = arith.addf %11, %14 : vector<1x64xf32>
    %16 = tpu.concatenate %7, %15 in 0 : vector<1x64xf32>, vector<1x64xf32> -> vector<2x64xf32>
    %c32 = arith.constant 32 : index
    %c0_11 = arith.constant 0 : index
    %17 = vector.load %arg1[%c32, %c0_11] : memref<98x64xf32, #tpu.memory_space<vmem>>, vector<1x64xf32>
    %18 = vector.broadcast %17 : vector<1x64xf32> to vector<2x64xf32>
    %19 = arith.addf %16, %18 : vector<2x64xf32>
    %cst = arith.constant 0.000000e+00 : f32
    %20 = vector.broadcast %cst : f32 to vector<2x64xf32>
    %21 = arith.maximumf %19, %20 : vector<2x64xf32>
    %c33 = arith.constant 33 : index
    %c0_12 = arith.constant 0 : index
    %22 = vector.load %arg1[%c33, %c0_12] : memref<98x64xf32, #tpu.memory_space<vmem>>, vector<64x64xf32>
    %c97 = arith.constant 97 : index
    %c0_13 = arith.constant 0 : index
    %23 = vector.load %arg1[%c97, %c0_13] : memref<98x64xf32, #tpu.memory_space<vmem>>, vector<1x64xf32>
    %cst_14 = arith.constant dense<0.000000e+00> : vector<2x64xf32>
    %24 = tpu.matmul %21, %22, %cst_14 {dimension_numbers = #tpu.dot_dimension_numbers<[1], [0], [0], [1], [0, 0, 1, 1], [], []>} : vector<2x64xf32>, vector<64x64xf32>, vector<2x64xf32> -> vector<2x64xf32>
    %25 = vector.broadcast %23 : vector<1x64xf32> to vector<2x64xf32>
    %26 = arith.addf %24, %25 : vector<2x64xf32>
    %cst_15 = arith.constant dense<0xFF800000> : vector<2xf32>
    %27 = vector.multi_reduction <maximumf>, %26, %cst_15 [1] : vector<2x64xf32> to vector<2xf32>
    %28 = vector.shape_cast %27 : vector<2xf32> to vector<2x1xf32>
    %29 = vector.broadcast %28 : vector<2x1xf32> to vector<2x64xf32>
    %30 = arith.subf %26, %29 : vector<2x64xf32>
    %31 = math.exp %30 : vector<2x64xf32>
    %cst_16 = arith.constant dense<0.000000e+00> : vector<2xf32>
    %32 = vector.multi_reduction <add>, %31, %cst_16 [1] : vector<2x64xf32> to vector<2xf32>
    %33 = vector.shape_cast %32 : vector<2xf32> to vector<2x1xf32>
    %34 = vector.broadcast %33 : vector<2x1xf32> to vector<2x64xf32>
    %35 = arith.divf %31, %34 : vector<2x64xf32>
    %36 = vector.extract_strided_slice %35 {offsets = [0, 0], sizes = [2, 8], strides = [1, 1]} : vector<2x64xf32> to vector<2x8xf32>
    %c0_17 = arith.constant 0 : index
    %c0_18 = arith.constant 0 : index
    %37 = vector.load %arg3[%c0_17, %c0_18] : memref<2x8xf32, #tpu.memory_space<vmem>>, vector<2x8xf32>
    tpu.vector_store %arg3[%c0_17, %c0_18], %36 {strides = array<i32>} : memref<2x8xf32, #tpu.memory_space<vmem>>, vector<2x8xf32>,
    %c0_19 = arith.constant 0 : index
    %c0_20 = arith.constant 0 : index
    %38 = vector.load %arg2[%c0_19, %c0_20] : memref<2x64xf32, #tpu.memory_space<vmem>>, vector<2x64xf32>
    %39 = arith.addf %26, %38 : vector<2x64xf32>
    %cst_21 = arith.constant dense<0xFF800000> : vector<2xf32>
    %40 = vector.multi_reduction <maximumf>, %39, %cst_21 [1] : vector<2x64xf32> to vector<2xf32>
    %41 = vector.shape_cast %40 : vector<2xf32> to vector<2x1xf32>
    %42 = tpu.iota {dimensions = array<i32: 1>} : vector<2x64xi32>
    %43 = vector.broadcast %41 : vector<2x1xf32> to vector<2x64xf32>
    %44 = arith.cmpf oge, %39, %43 : vector<2x64xf32>
    %c64_i32 = arith.constant 64 : i32
    %45 = vector.broadcast %c64_i32 : i32 to vector<2x64xi32>
    %46 = arith.select %44, %42, %45 : vector<2x64xi1>, vector<2x64xi32>
    %cst_22 = arith.constant dense<2147483647> : vector<2xi32>
    %47 = vector.multi_reduction <minsi>, %46, %cst_22 [1] : vector<2x64xi32> to vector<2xi32>
    %48 = vector.shape_cast %47 : vector<2xi32> to vector<2x1xi32>
    %49 = vector.extract_strided_slice %48 {offsets = [0, 0], sizes = [1, 1], strides = [1, 1]} : vector<2x1xi32> to vector<1x1xi32>
    %c0_23 = arith.constant 0 : index
    %c0_24 = arith.constant 0 : index
    %50 = vector.load %arg4[%c0_23, %c0_24] : memref<1x1xi32, #tpu.memory_space<vmem>>, vector<1x1xi32>
    tpu.vector_store %arg4[%c0_23, %c0_24], %49 {strides = array<i32>} : memref<1x1xi32, #tpu.memory_space<vmem>>, vector<1x1xi32>,
    return
  }
}

</mosaic_0001>

<llo_original>
// kernel: deterministic_actor_forward.1
$region0: #{deterministic_actor_forward.1}
  #allocation0 [shape = 'u32[]', space=smem, size = 0x4, offset = 0x4, fixed_abs, tag = 'smem constant byte address 0x4 - core index']
  #allocation1 [shape = 'u32[72,128]{1,0:T(1,128)}', space=vmem, size = 0x9000, scoped, tag = 'internal scratch']
  %s0 = inlined_call_operand.vmem [shape: s32[2,2], index: 0, kind: input, shape index: {}]
  %s1 = inlined_call_operand.vmem [shape: f32[98,64], index: 1, kind: input, shape index: {}]
  %s2 = inlined_call_operand.vmem [shape: f32[2,64], index: 2, kind: input, shape index: {}]
  %s3 = inlined_call_operand.hbm [shape: f32[2,8], index: 3, kind: output, shape index: {0}]
  %s4 = inlined_call_operand.hbm [shape: s32[1,1], index: 4, kind: output, shape index: {1}]
  %5 = xla_tuple %s3, %s4
  %s6 = sld [smem:[#allocation0]]
  $region34: #{deterministic_actor_forward.1} parent=0
    _
  %s8 = ssub.s32 1, %s6
  %s9 = scalar_select 0, %s8, %s6
  $region1: #{deterministic_actor_forward.1} parent=0
    #allocation2 [shape = 'u8[1024]{0}', space=smem, size = 0x400, scoped, tag = 'input window, operand 0, single buffered']
    #allocation3 [shape = 's32[1]{0}', space=sflag, size = 0x4, scoped, tag = 'scoped memory for deterministic_actor_forward.1']
    #allocation4 [shape = 's32[1]{0}', space=sflag, size = 0x4, scoped, tag = 'scoped memory for deterministic_actor_forward.1']
    #allocation5 [shape = 'u8[1024]{0}', space=vmem, size = 0x400, scoped, tag = 'output window, operand 0, single buffered']
    #allocation6 [shape = 'u8[512]{0}', space=vmem, size = 0x400, scoped, tag = 'output window, operand 1, single buffered']
    #allocation7 [shape = 's32[1]{0}', space=sflag, size = 0x4, scoped, tag = 'scoped memory for deterministic_actor_forward.1']
    %10 = vsyncpa [#allocation4], 0
    %11 = vsyncpa [#allocation3], 0
    %12 = vsyncpa [#allocation7], 0
    // Predicated region
    $region2: #{deterministic_actor_forward.1} parent=1 // pred_check
      _
    $region3: #{deterministic_actor_forward.1} parent=1 // pred_check_branch
      %14 = sbr.rel (0) target = $region5
    $region4: #{deterministic_actor_forward.1} parent=1 // pred_region
      %16 = vsyncadd [#allocation4], 0
      %s18 = sshll.u32 %s0, 4
      %s19 = int_to_ptr.vmem [resolvable:$true] %s18
      %21 = dma.vmem_to_smem %s19, 32, [#allocation2], [#allocation4]
    $region5: #{deterministic_actor_forward.1} parent=1 // pred_fallthru
      _
    // Predicated region
    $region6: #{deterministic_actor_forward.1} parent=1 // pred_check
      _
    $region7: #{deterministic_actor_forward.1} parent=1 // pred_check_branch
      %23 = sbr.rel (0) target = $region9
    $region8: #{deterministic_actor_forward.1} parent=1 // pred_region
      _
    $region9: #{deterministic_actor_forward.1} parent=1 // pred_fallthru
      _
    // Predicated region
    $region10: #{deterministic_actor_forward.1} parent=1 // pred_check
      _
    $region11: #{deterministic_actor_forward.1} parent=1 // pred_check_branch
      %25 = sbr.rel (0) target = $region13
    $region12: #{deterministic_actor_forward.1} parent=1 // pred_region
      _
    $region13: #{deterministic_actor_forward.1} parent=1 // pred_fallthru
      _
    // Predicated region
    $region14: #{deterministic_actor_forward.1} parent=1 // pred_check
      _
    $region15: #{deterministic_actor_forward.1} parent=1 // pred_check_branch
      %27 = sbr.rel (0) target = $region17
    $region16: #{deterministic_actor_forward.1} parent=1 // pred_region
      %29 = dma.done [#allocation4], 32
    $region17: #{deterministic_actor_forward.1} parent=1 // pred_fallthru
      _
    %30 = sfence
    %s31 = sld [smem:[#allocation2]]
    %s32 = sld [smem:[#allocation2 + $0x1]]
    %s33 = scalar_lea.vmem %s1, %s31
    %v34 = vld [vmem:[%s33] sm:$0x1]
    %s35 = sadd.s32 %s32, 16
    %s36 = scalar_lea.vmem %s1, %s35
    %v37 = vld [vmem:[%s36] sm:$0x1]
    %v38 = vadd.f32 %v34, %v37
    %s39 = sld [smem:[#allocation2 + $0x80]]
    %s40 = sld [smem:[#allocation2 + $0x81]]
    %s41 = scalar_lea.vmem %s1, %s39
    %v42 = vld [vmem:[%s41] sm:$0x1]
    %s43 = sadd.s32 %s40, 16
    %s44 = scalar_lea.vmem %s1, %s43
    %v45 = vld [vmem:[%s44] sm:$0x1]
    %v46 = vadd.f32 %v42, %v45
    %v48 = vrot.slane %v46, 7
    %vm50 = vcmask 1040384
    %v51 = vsel %vm50, %v38, %v48
    %v52 = vld [vmem:[%s1 + $0x20] sm:$0x1]
    %v53 = vperm.slane %v52, 0
    %v54 = vadd.f32 %v51, %v53
    %v55 = vmax.f32 %v54, 0.0
    %v56 = vld [vmem:[%s1 + $0x21] sm:$0xff]
    %v57 = vld [vmem:[%s1 + $0x29] sm:$0xff]
    %v58 = vld [vmem:[%s1 + $0x31] sm:$0xff]
    %v59 = vld [vmem:[%s1 + $0x39] sm:$0xff]
    %v60 = vld [vmem:[%s1 + $0x41] sm:$0xff]
    %v61 = vld [vmem:[%s1 + $0x49] sm:$0xff]
    %v62 = vld [vmem:[%s1 + $0x51] sm:$0xff]
    %v63 = vld [vmem:[%s1 + $0x59] sm:$0xff]
    %v64 = vld [vmem:[%s1 + $0x61] sm:$0x1]
    %v65 = vperm.slane %v64, 0
    %vm66 = vcmask 523264
    %v68 = vsel %vm66, %v55, 0
    %70 = vmatpush.msra.mxu0 0.0
    %71 = vmatpush.msra.mxu0 0.0
    %72 = vmatpush.msra.mxu0 0.0
    %73 = vmatpush.msra.mxu0 0.0
    %74 = vmatpush.msra.mxu0 0.0
    %75 = vmatpush.msra.mxu0 0.0
    %76 = vmatpush.msra.mxu0 0.0
    %77 = vmatpush.msra.mxu0 0.0
    %78 = vmatpush.msra.mxu0 %v63
    %79 = vmatpush.msra.mxu0 %v62
    %80 = vmatpush.msra.mxu0 %v61
    %81 = vmatpush.msra.mxu0 %v60
    %82 = vmatpush.msra.mxu0 %v59
    %83 = vmatpush.msra.mxu0 %v58
    %84 = vmatpush.msra.mxu0 %v57
    %85 = vmatpush.msra.mxu0 %v56
    %86 = vmatmul.f32.gmra.mxu0 %v68
    %v87 = vpop.f32.mrf.mxu0
    %v88 = vadd.f32 %v65, %v87
    %89 = vdwg.mxu0
    %vm90 = vcmask 517120
    %v91 = vsel %vm90, %v88, -inf
    %92 = vmax.xlane.f32.xlu0 %v91
    %v93 = vpop.xlane.xlu0 %92
    %v94 = vsub.f32 %v88, %v93
    %v95 = vmul.f32 %v94, 1.442695
    %v96 = vpow.pop %v95
    %v97 = vsel %vm90, %v96, 0.0
    %98 = vadd.xlane.f32.xlu0 %v97
    %v99 = vpop.xlane.xlu0 %98
    %v100 = vrcp.pop %v99
    %v101 = vmul.f32 %v99, %v100
    %v102 = vsub.f32 1.0, %v101
    %v103 = vmul.f32 %v100, %v102
    %v104 = vadd.f32 %v100, %v103
    %vm105 = vweird.f32 %v99
    %vm106 = vweird.f32 %v100
    %vm107 = vmor %vm105, %vm106
    %v108 = vsel %vm107, %v100, %v104
    %v109 = vand.u32 2147483647, %v99
    %vm110 = vcmp.eq.f32.partialorder %v109, 8.507059e+37
    %v111 = vand.u32 %v99, 2147483648
    %v112 = vor.u32 1.1754944e-38, %v111
    %v113 = vsel %vm110, %v112, %v108
    %v114 = vmul.f32 %v96, %v113
    %vm115 = vcmask 58368
    %116 = vst.msk [vmem:[#allocation5] sm:$0x3] %vm115, %v114
    %v117 = vld [vmem:[%s2] sm:$0x3]
    %v118 = vadd.f32 %v88, %v117
    %v119 = vsel %vm90, %v118, -inf
    %120 = vmax.xlane.f32.xlu0 %v119
    %v121 = vpop.xlane.xlu0 %120
    %v122 = vlaneseq
    %v123 = vand.u32 %v122, 127
    %vm124 = vcmp.ge.f32.partialorder %v118, %v121
    %v125 = vsel %vm124, %v123, 64
    %v126 = vsel %vm90, %v125, 2147483647
    %v127 = vand.u32 %v126, 65535
    %v128 = vshra.s32 %v126, 16
    %v129 = vcvt.s32.f32 %v127
    %v130 = vcvt.s32.f32 %v128
    %131 = vmin.xlane.f32.xlu0 %v130
    %v132 = vpop.xlane.xlu0 %131
    %vm133 = vcmp.eq.f32.partialorder %v130, %v132
    %v134 = vsel %vm133, %v129, inf
    %135 = vmin.xlane.f32.xlu0 %v134
    %v136 = vpop.xlane.xlu0 %135
    %v137 = vcvt.f32.s32 %v136
    %v138 = vcvt.f32.s32 %v132
    %v139 = vshll.u32 %v138, 16
    %v140 = vadd.s32 %v139, %v137
    %vm141 = vcmask 0
    %142 = vst.msk [vmem:[#allocation6] sm:$0x1] %vm141, %v140
    // Predicated region
    $region18: #{deterministic_actor_forward.1} parent=1 // pred_check
      _
    $region19: #{deterministic_actor_forward.1} parent=1 // pred_check_branch
      %144 = sbr.rel (0) target = $region21
    $region20: #{deterministic_actor_forward.1} parent=1 // pred_region
      %146 = vsyncadd [#allocation3], 0
      %s148 = sshll.u32 [#allocation5], 4
      %s149 = int_to_ptr.vmem [resolvable:$true] %s148
      %s150 = sshll.u32 %s3, 4
      %s151 = int_to_ptr.hbm [resolvable:$true] %s150
      %153 = dma.vmem_to_hbm [thread:$0]  %s149, 32, %s151, [#allocation3]
    $region21: #{deterministic_actor_forward.1} parent=1 // pred_fallthru
      _
    // Predicated region
    $region22: #{deterministic_actor_forward.1} parent=1 // pred_check
      _
    $region23: #{deterministic_actor_forward.1} parent=1 // pred_check_branch
      %155 = sbr.rel (0) target = $region25
    $region24: #{deterministic_actor_forward.1} parent=1 // pred_region
      %157 = vsyncadd [#allocation7], 0
      %s159 = sshll.u32 [#allocation6], 4
      %s160 = int_to_ptr.vmem [resolvable:$true] %s159
      %s161 = sshll.u32 %s4, 4
      %s162 = int_to_ptr.hbm [resolvable:$true] %s161
      %164 = dma.vmem_to_hbm [thread:$0]  %s160, 16, %s162, [#allocation7]
    $region25: #{deterministic_actor_forward.1} parent=1 // pred_fallthru
      _
    // Predicated region
    $region26: #{deterministic_actor_forward.1} parent=1 // pred_check
      _
    $region27: #{deterministic_actor_forward.1} parent=1 // pred_check_branch
      %166 = sbr.rel (0) target = $region29
    $region28: #{deterministic_actor_forward.1} parent=1 // pred_region
      %168 = dma.done [#allocation3], 32
    $region29: #{deterministic_actor_forward.1} parent=1 // pred_fallthru
      _
    // Predicated region
    $region30: #{deterministic_actor_forward.1} parent=1 // pred_check
      _
    $region31: #{deterministic_actor_forward.1} parent=1 // pred_check_branch
      %170 = sbr.rel (0) target = $region33
    $region32: #{deterministic_actor_forward.1} parent=1 // pred_region
      %172 = dma.done [#allocation7], 16
    $region33: #{deterministic_actor_forward.1} parent=1 // pred_fallthru
      _
    %173 = vsyncpa [#allocation3], 1
    %174 = vsyncpa [#allocation7], 1
    %175 = vsyncpa [#allocation4], 1

</llo_original>
